<compile_context>
chip_gen: v7x
topology: tpu7x:2x2x1
jax: 0.10.0
libtpu: 0.0.40
codegen_flags: <defaults>
</compile_context>

<pallas_src>
import jax
import jax.numpy as jnp
from jax.experimental import pallas as pl
from jax.experimental.pallas import tpu as pltpu

N_ACTIONS = 3


def _bq_kernel(w1_ref, b1_ref, w2_ref, b2_ref, w3t_ref, b3_ref, out_ref):
    """All nets vectorized in one pass; params are tiny and fully VMEM-resident."""
    # Layer 1: Linear(1, H) applied to [1.0]  ==  W1[:, 0] + b1, then ReLU.
    h1 = jnp.maximum(w1_ref[...] + b1_ref[...], 0.0)                     # (N, H), H on lanes

    # Layer 2: per-net (H,H) @ h1 for all nets at once. H_in stays on the lane
    # axis (no relayout of h1); lane-reduce per output unit.
    h2 = jnp.sum(h1[:, None, :] * w2_ref[...], axis=-1, keepdims=True)   # (N, H, 1)
    h2 = jnp.maximum(h2 + b2_ref[...][:, :, None], 0.0)                  # (N, H, 1), H on sublanes

    # Layer 3: h2 is already (N, H, 1) with H on sublanes, matching w3t's
    # (N, H, 3) layout — sublane reduce over H, tiny (N, 3) masked store.
    out = jnp.sum(h2 * w3t_ref[...], axis=1) + b3_ref[...]               # (N, 3)
    out_ref[...] = out


def batch_q_forward(params, a=None):
    """Pallas equivalent of batch_Q_approx.forward(a) (input `a` is ignored)."""
    del a  # the PyTorch module ignores its argument
    w1, b1, w2, b2, w3t, b3 = params
    n_nets = w1.shape[0]

    vmem = pl.BlockSpec(memory_space=pltpu.MemorySpace.VMEM)
    return pl.pallas_call(
        _bq_kernel,
        out_shape=jax.ShapeDtypeStruct((n_nets, N_ACTIONS), jnp.float32),
        in_specs=[vmem] * 6,
        out_specs=vmem,
    )(w1, b1, w2, b2, w3t, b3)


def init_torch_params(key, hidden, n_nets):
    """Params in PyTorch nn.Linear layout, U(-1/sqrt(fan_in), +1/sqrt(fan_in))."""
    k1, k2, k3, k4, k5, k6 = jax.random.split(key, 6)
    lim1 = 1.0                      # fan_in of Linear(1, H)
    limh = 1.0 / (hidden ** 0.5)    # fan_in of Linear(H, *)

    W1 = jax.random.uniform(k1, (n_nets, hidden, 1), jnp.float32, -lim1, lim1)
    b1 = jax.random.uniform(k2, (n_nets, hidden), jnp.float32, -lim1, lim1)
    W2 = jax.random.uniform(k3, (n_nets, hidden, hidden), jnp.float32, -limh, limh)
    b2 = jax.random.uniform(k4, (n_nets, hidden), jnp.float32, -limh, limh)
    W3 = jax.random.uniform(k5, (n_nets, N_ACTIONS, hidden), jnp.float32, -limh, limh)
    b3 = jax.random.uniform(k6, (n_nets, N_ACTIONS), jnp.float32, -limh, limh)
    return W1, b1, W2, b2, W3, b3


def pack_params(torch_params):
    """Kernel layout: W1 squeezed, W2 untransposed (H_out, H_in), W3 transposed."""
    W1, b1, W2, b2, W3, b3 = torch_params
    w1 = W1[:, :, 0]                        # (N, H)   -- input is the scalar 1.0
    w2 = W2                                 # (N, H_out, H_in), H_in on lanes
    w3t = jnp.transpose(W3, (0, 2, 1))      # (N, H, 3)
    return w1, b1, w2, b2, w3t, b3


def torch_reference(torch_params):
    """Per-net, torch-layout ground truth (mirrors the nn.Sequential exactly)."""
    W1, b1, W2, b2, W3, b3 = torch_params
    outs = []
    for n in range(W1.shape[0]):
        h1 = jnp.maximum(W1[n][:, 0] * 1.0 + b1[n], 0.0)       # Linear(1,H) on [1.0]
        h2 = jnp.maximum(W2[n] @ h1 + b2[n], 0.0)              # Linear(H,H)
        outs.append(W3[n] @ h2 + b3[n])                        # Linear(H,3)
    return jnp.stack(outs)


if __name__ == "__main__":
    hidden = 32
    n_nets = 8

    key = jax.random.PRNGKey(0)
    pkey, akey = jax.random.split(key)
    torch_params = init_torch_params(pkey, hidden, n_nets)
    params = pack_params(torch_params)

    # `a` is an (ignored) action index, mirroring the torch forward(a) signature.
    a = jax.random.randint(akey, (2,), 0, N_ACTIONS)

    out = jax.block_until_ready(batch_q_forward(params, a))
    ref = torch_reference(torch_params)

    assert out.shape == (n_nets, N_ACTIONS)
    assert out.dtype == jnp.float32
    assert jnp.allclose(out, ref, atol=1e-5, rtol=1e-5)

    print("KERNEL_OK")
</pallas_src>

<mosaic_0001>
module attributes {stable_mosaic.version = 11 : i64} {
  func.func @_bq_kernel(%arg0: memref<8x32xf32, #tpu.memory_space<vmem>>, %arg1: memref<8x32xf32, #tpu.memory_space<vmem>>, %arg2: memref<8x32x32xf32, #tpu.memory_space<vmem>>, %arg3: memref<8x32xf32, #tpu.memory_space<vmem>>, %arg4: memref<8x32x3xf32, #tpu.memory_space<vmem>>, %arg5: memref<8x3xf32, #tpu.memory_space<vmem>>, %arg6: memref<8x3xf32, #tpu.memory_space<vmem>>) attributes {dimension_semantics = [], scalar_prefetch = 0 : i64, scratch_operands = 0 : i64, tpu.core_type = #tpu.core_type<tc>} {
    %c0 = arith.constant 0 : index
    %c0_0 = arith.constant 0 : index
    %0 = vector.load %arg0[%c0, %c0_0] : memref<8x32xf32, #tpu.memory_space<vmem>>, vector<8x32xf32>
    %c0_1 = arith.constant 0 : index
    %c0_2 = arith.constant 0 : index
    %1 = vector.load %arg1[%c0_1, %c0_2] : memref<8x32xf32, #tpu.memory_space<vmem>>, vector<8x32xf32>
    %2 = arith.addf %0, %1 : vector<8x32xf32>
    %cst = arith.constant 0.000000e+00 : f32
    %3 = vector.broadcast %cst : f32 to vector<8x32xf32>
    %4 = arith.maximumf %2, %3 : vector<8x32xf32>
    %5 = vector.shape_cast %4 : vector<8x32xf32> to vector<8x1x32xf32>
    %c0_3 = arith.constant 0 : index
    %c0_4 = arith.constant 0 : index
    %c0_5 = arith.constant 0 : index
    %6 = vector.load %arg2[%c0_3, %c0_4, %c0_5] : memref<8x32x32xf32, #tpu.memory_space<vmem>>, vector<8x32x32xf32>
    %7 = vector.broadcast %5 : vector<8x1x32xf32> to vector<8x32x32xf32>
    %8 = arith.mulf %7, %6 : vector<8x32x32xf32>
    %cst_6 = arith.constant dense<0.000000e+00> : vector<8x32xf32>
    %9 = vector.multi_reduction <add>, %8, %cst_6 [2] : vector<8x32x32xf32> to vector<8x32xf32>
    %10 = vector.shape_cast %9 : vector<8x32xf32> to vector<8x32x1xf32>
    %c0_7 = arith.constant 0 : index
    %c0_8 = arith.constant 0 : index
    %11 = vector.load %arg3[%c0_7, %c0_8] : memref<8x32xf32, #tpu.memory_space<vmem>>, vector<8x32xf32>
    %12 = vector.shape_cast %11 : vector<8x32xf32> to vector<8x32x1xf32>
    %13 = arith.addf %10, %12 : vector<8x32x1xf32>
    %cst_9 = arith.constant 0.000000e+00 : f32
    %14 = vector.broadcast %cst_9 : f32 to vector<8x32x1xf32>
    %15 = arith.maximumf %13, %14 : vector<8x32x1xf32>
    %c0_10 = arith.constant 0 : index
    %c0_11 = arith.constant 0 : index
    %c0_12 = arith.constant 0 : index
    %16 = vector.load %arg4[%c0_10, %c0_11, %c0_12] : memref<8x32x3xf32, #tpu.memory_space<vmem>>, vector<8x32x3xf32>
    %17 = vector.broadcast %15 : vector<8x32x1xf32> to vector<8x32x3xf32>
    %18 = arith.mulf %17, %16 : vector<8x32x3xf32>
    %cst_13 = arith.constant dense<0.000000e+00> : vector<8x3xf32>
    %19 = vector.multi_reduction <add>, %18, %cst_13 [1] : vector<8x32x3xf32> to vector<8x3xf32>
    %c0_14 = arith.constant 0 : index
    %c0_15 = arith.constant 0 : index
    %20 = vector.load %arg5[%c0_14, %c0_15] : memref<8x3xf32, #tpu.memory_space<vmem>>, vector<8x3xf32>
    %21 = arith.addf %19, %20 : vector<8x3xf32>
    %c0_16 = arith.constant 0 : index
    %c0_17 = arith.constant 0 : index
    %22 = vector.load %arg6[%c0_16, %c0_17] : memref<8x3xf32, #tpu.memory_space<vmem>>, vector<8x3xf32>
    tpu.vector_store %arg6[%c0_16, %c0_17], %21 {strides = array<i32>} : memref<8x3xf32, #tpu.memory_space<vmem>>, vector<8x3xf32>,
    return
  }
}

</mosaic_0001>

<llo_original>
// kernel: tpu_custom_call.1
$region0: #{tpu_custom_call.1}
  #allocation0 [shape = 'u32[]', space=smem, size = 0x4, offset = 0x4, fixed_abs, tag = 'smem constant byte address 0x4 - core index']
  #allocation1 [shape = 'u32[144,128]{1,0:T(1,128)}', space=vmem, size = 0x12000, scoped, tag = 'internal scratch']
  %s0 = inlined_call_operand.vmem [shape: f32[8,32], index: 0, kind: input, shape index: {}]
  %s1 = inlined_call_operand.vmem [shape: f32[8,32], index: 1, kind: input, shape index: {}]
  %s2 = inlined_call_operand.vmem [shape: f32[8,32,32], index: 2, kind: input, shape index: {}]
  %s3 = inlined_call_operand.vmem [shape: f32[8,32], index: 3, kind: input, shape index: {}]
  %s4 = inlined_call_operand.vmem [shape: f32[8,32,3], index: 4, kind: input, shape index: {}]
  %s5 = inlined_call_operand.vmem [shape: f32[8,3], index: 5, kind: input, shape index: {}]
  %s6 = inlined_call_operand.vmem [shape: f32[8,3], index: 6, kind: output, shape index: {}]
  %s7 = sld [smem:[#allocation0]]
  $region34: #{tpu_custom_call.1} parent=0
    _
  %s9 = ssub.s32 1, %s7
  %s10 = scalar_select 0, %s9, %s7
  // Predicated region
  $region2: #{tpu_custom_call.1} parent=0 // pred_check
    _
  $region3: #{tpu_custom_call.1} parent=0 // pred_check_branch
    %12 = sbr.rel (0) target = $region5
  $region4: #{tpu_custom_call.1} parent=0 // pred_region
    _
  $region5: #{tpu_custom_call.1} parent=0 // pred_fallthru
    _
  // Predicated region
  $region6: #{tpu_custom_call.1} parent=0 // pred_check
    _
  $region7: #{tpu_custom_call.1} parent=0 // pred_check_branch
    %14 = sbr.rel (0) target = $region9
  $region8: #{tpu_custom_call.1} parent=0 // pred_region
    _
  $region9: #{tpu_custom_call.1} parent=0 // pred_fallthru
    _
  // Predicated region
  $region10: #{tpu_custom_call.1} parent=0 // pred_check
    _
  $region11: #{tpu_custom_call.1} parent=0 // pred_check_branch
    %16 = sbr.rel (0) target = $region13
  $region12: #{tpu_custom_call.1} parent=0 // pred_region
    _
  $region13: #{tpu_custom_call.1} parent=0 // pred_fallthru
    _
  // Predicated region
  $region14: #{tpu_custom_call.1} parent=0 // pred_check
    _
  $region15: #{tpu_custom_call.1} parent=0 // pred_check_branch
    %18 = sbr.rel (0) target = $region17
  $region16: #{tpu_custom_call.1} parent=0 // pred_region
    _
  $region17: #{tpu_custom_call.1} parent=0 // pred_fallthru
    _
  // Predicated region
  $region18: #{tpu_custom_call.1} parent=0 // pred_check
    _
  $region19: #{tpu_custom_call.1} parent=0 // pred_check_branch
    %20 = sbr.rel (0) target = $region21
  $region20: #{tpu_custom_call.1} parent=0 // pred_region
    _
  $region21: #{tpu_custom_call.1} parent=0 // pred_fallthru
    _
  // Predicated region
  $region22: #{tpu_custom_call.1} parent=0 // pred_check
    _
  $region23: #{tpu_custom_call.1} parent=0 // pred_check_branch
    %22 = sbr.rel (0) target = $region25
  $region24: #{tpu_custom_call.1} parent=0 // pred_region
    _
  $region25: #{tpu_custom_call.1} parent=0 // pred_fallthru
    _
  %v23 = vld [vmem:[%s0] sm:$0xff]
  %v24 = vld [vmem:[%s1] sm:$0xff]
  %v25 = vadd.f32 %v23, %v24
  %v26 = vmax.f32 %v25, 0.0
  %v28 = vcombine.high %v26, %v26
  %v30 = vunpack.c.l.s4 1966171168
  %v31 = vunpack.c.0.s8 %v30
  %v32 = vlaneseq
  %v33 = vshrl.u32 %v32, 7
  %v34 = vsub.s32 %v31, %v33
  %v35 = vrot.slane %v26, %v34
  %v37 = vunpack.c.l.s4 1966171168
  %v38 = vunpack.c.0.s8 %v37
  %v39 = vlaneseq
  %v40 = vshrl.u32 %v39, 7
  %v41 = vsub.s32 %v38, %v40
  %v42 = vrot.slane %v28, %v41
  %v43 = vcombine.high %v35, %v35
  %v44 = vcombine.high %v42, %v42
  %v46 = vunpack.c.l.s4 1966171168
  %v47 = vunpack.c.0.s8 %v46
  %v48 = vlaneseq
  %v49 = vshrl.u32 %v48, 7
  %v50 = vsub.s32 %v47, %v49
  %v51 = vrot.slane %v35, %v50
  %v53 = vunpack.c.l.s4 1966171168
  %v54 = vunpack.c.0.s8 %v53
  %v55 = vlaneseq
  %v56 = vshrl.u32 %v55, 7
  %v57 = vsub.s32 %v54, %v56
  %v58 = vrot.slane %v42, %v57
  %v60 = vunpack.c.l.s4 1966171168
  %v61 = vunpack.c.0.s8 %v60
  %v62 = vlaneseq
  %v63 = vshrl.u32 %v62, 7
  %v64 = vsub.s32 %v61, %v63
  %v65 = vrot.slane %v43, %v64
  %v67 = vunpack.c.l.s4 1966171168
  %v68 = vunpack.c.0.s8 %v67
  %v69 = vlaneseq
  %v70 = vshrl.u32 %v69, 7
  %v71 = vsub.s32 %v68, %v70
  %v72 = vrot.slane %v44, %v71
  %v73 = vcombine.high %v51, %v51
  %v74 = vcombine.high %v58, %v58
  %v75 = vcombine.high %v65, %v65
  %v76 = vcombine.high %v72, %v72
  %v77 = vld [vmem:[%s2] sm:$0xff]
  %v78 = vld [vmem:[%s2 + $0x8] sm:$0xff]
  %v79 = vld [vmem:[%s2 + $0x10] sm:$0xff]
  %v80 = vld [vmem:[%s2 + $0x18] sm:$0xff]
  %v81 = vld [vmem:[%s2 + $0x20] sm:$0xff]
  %v82 = vld [vmem:[%s2 + $0x28] sm:$0xff]
  %v83 = vld [vmem:[%s2 + $0x30] sm:$0xff]
  %v84 = vld [vmem:[%s2 + $0x38] sm:$0xff]
  %v85 = vld [vmem:[%s2 + $0x40] sm:$0xff]
  %v86 = vld [vmem:[%s2 + $0x48] sm:$0xff]
  %v87 = vld [vmem:[%s2 + $0x50] sm:$0xff]
  %v88 = vld [vmem:[%s2 + $0x58] sm:$0xff]
  %v89 = vld [vmem:[%s2 + $0x60] sm:$0xff]
  %v90 = vld [vmem:[%s2 + $0x68] sm:$0xff]
  %v91 = vld [vmem:[%s2 + $0x70] sm:$0xff]
  %v92 = vld [vmem:[%s2 + $0x78] sm:$0xff]
  %v93 = vld [vmem:[%s2 + $0x80] sm:$0xff]
  %v94 = vld [vmem:[%s2 + $0x88] sm:$0xff]
  %v95 = vld [vmem:[%s2 + $0x90] sm:$0xff]
  %v96 = vld [vmem:[%s2 + $0x98] sm:$0xff]
  %v97 = vld [vmem:[%s2 + $0xa0] sm:$0xff]
  %v98 = vld [vmem:[%s2 + $0xa8] sm:$0xff]
  %v99 = vld [vmem:[%s2 + $0xb0] sm:$0xff]
  %v100 = vld [vmem:[%s2 + $0xb8] sm:$0xff]
  %v101 = vld [vmem:[%s2 + $0xc0] sm:$0xff]
  %v102 = vld [vmem:[%s2 + $0xc8] sm:$0xff]
  %v103 = vld [vmem:[%s2 + $0xd0] sm:$0xff]
  %v104 = vld [vmem:[%s2 + $0xd8] sm:$0xff]
  %v105 = vld [vmem:[%s2 + $0xe0] sm:$0xff]
  %v106 = vld [vmem:[%s2 + $0xe8] sm:$0xff]
  %v107 = vld [vmem:[%s2 + $0xf0] sm:$0xff]
  %v108 = vld [vmem:[%s2 + $0xf8] sm:$0xff]
  %v109 = vlaneseq
  %v110 = vshrl.u32 %v109, 7
  %v111 = vsub.s32 0, %v110
  %v112 = vrot.slane %v51, %v111
  %v113 = vlaneseq
  %v114 = vshrl.u32 %v113, 7
  %v115 = vsub.s32 0, %v114
  %v116 = vrot.slane %v65, %v115
  %v117 = vlaneseq
  %v118 = vshrl.u32 %v117, 7
  %v119 = vsub.s32 0, %v118
  %v120 = vrot.slane %v73, %v119
  %v121 = vlaneseq
  %v122 = vshrl.u32 %v121, 7
  %v123 = vsub.s32 0, %v122
  %v124 = vrot.slane %v75, %v123
  %v125 = vlaneseq
  %v126 = vshrl.u32 %v125, 7
  %v127 = vsub.s32 0, %v126
  %v128 = vrot.slane %v58, %v127
  %v129 = vlaneseq
  %v130 = vshrl.u32 %v129, 7
  %v131 = vsub.s32 0, %v130
  %v132 = vrot.slane %v72, %v131
  %v133 = vlaneseq
  %v134 = vshrl.u32 %v133, 7
  %v135 = vsub.s32 0, %v134
  %v136 = vrot.slane %v74, %v135
  %v137 = vlaneseq
  %v138 = vshrl.u32 %v137, 7
  %v139 = vsub.s32 0, %v138
  %v140 = vrot.slane %v76, %v139
  %v149 = vmul.f32 %v112, %v77
  %v150 = vmul.f32 %v112, %v78
  %v151 = vmul.f32 %v112, %v79
  %v152 = vmul.f32 %v112, %v80
  %v153 = vmul.f32 %v116, %v81
  %v154 = vmul.f32 %v116, %v82
  %v155 = vmul.f32 %v116, %v83
  %v156 = vmul.f32 %v116, %v84
  %v157 = vmul.f32 %v120, %v85
  %v158 = vmul.f32 %v120, %v86
  %v159 = vmul.f32 %v120, %v87
  %v160 = vmul.f32 %v120, %v88
  %v161 = vmul.f32 %v124, %v89
  %v162 = vmul.f32 %v124, %v90
  %v163 = vmul.f32 %v124, %v91
  %v164 = vmul.f32 %v124, %v92
  %v165 = vmul.f32 %v128, %v93
  %v166 = vmul.f32 %v128, %v94
  %v167 = vmul.f32 %v128, %v95
  %v168 = vmul.f32 %v128, %v96
  %v169 = vmul.f32 %v132, %v97
  %v170 = vmul.f32 %v132, %v98
  %v171 = vmul.f32 %v132, %v99
  %v172 = vmul.f32 %v132, %v100
  %v173 = vmul.f32 %v136, %v101
  %v174 = vmul.f32 %v136, %v102
  %v175 = vmul.f32 %v136, %v103
  %v176 = vmul.f32 %v136, %v104
  %v177 = vmul.f32 %v140, %v105
  %v178 = vmul.f32 %v140, %v106
  %v179 = vmul.f32 %v140, %v107
  %v180 = vmul.f32 %v140, %v108
  %vm181 = vcmask 261120
  %v182 = vsel %vm181, %v149, 0.0
  %183 = vadd.xlane.f32.xlu0 %v182
  %v184 = vpop.xlane.xlu0 %183
  %v185 = vsel %vm181, %v150, 0.0
  %186 = vadd.xlane.f32.xlu0 %v185
  %v187 = vpop.xlane.xlu0 %186
  %v188 = vsel %vm181, %v151, 0.0
  %189 = vadd.xlane.f32.xlu0 %v188
  %v190 = vpop.xlane.xlu0 %189
  %v191 = vsel %vm181, %v152, 0.0
  %192 = vadd.xlane.f32.xlu0 %v191
  %v193 = vpop.xlane.xlu0 %192
  %v194 = vsel %vm181, %v153, 0.0
  %195 = vadd.xlane.f32.xlu0 %v194
  %v196 = vpop.xlane.xlu0 %195
  %v197 = vsel %vm181, %v154, 0.0
  %198 = vadd.xlane.f32.xlu0 %v197
  %v199 = vpop.xlane.xlu0 %198
  %v200 = vsel %vm181, %v155, 0.0
  %201 = vadd.xlane.f32.xlu0 %v200
  %v202 = vpop.xlane.xlu0 %201
  %v203 = vsel %vm181, %v156, 0.0
  %204 = vadd.xlane.f32.xlu0 %v203
  %v205 = vpop.xlane.xlu0 %204
  %v206 = vsel %vm181, %v157, 0.0
  %207 = vadd.xlane.f32.xlu0 %v206
  %v208 = vpop.xlane.xlu0 %207
  %v209 = vsel %vm181, %v158, 0.0
  %210 = vadd.xlane.f32.xlu0 %v209
  %v211 = vpop.xlane.xlu0 %210
  %v212 = vsel %vm181, %v159, 0.0
  %213 = vadd.xlane.f32.xlu0 %v212
  %v214 = vpop.xlane.xlu0 %213
  %v215 = vsel %vm181, %v160, 0.0
  %216 = vadd.xlane.f32.xlu0 %v215
  %v217 = vpop.xlane.xlu0 %216
  %v218 = vsel %vm181, %v161, 0.0
  %219 = vadd.xlane.f32.xlu0 %v218
  %v220 = vpop.xlane.xlu0 %219
  %v221 = vsel %vm181, %v162, 0.0
  %222 = vadd.xlane.f32.xlu0 %v221
  %v223 = vpop.xlane.xlu0 %222
  %v224 = vsel %vm181, %v163, 0.0
  %225 = vadd.xlane.f32.xlu0 %v224
  %v226 = vpop.xlane.xlu0 %225
  %v227 = vsel %vm181, %v164, 0.0
  %228 = vadd.xlane.f32.xlu0 %v227
  %v229 = vpop.xlane.xlu0 %228
  %v230 = vsel %vm181, %v165, 0.0
  %231 = vadd.xlane.f32.xlu0 %v230
  %v232 = vpop.xlane.xlu0 %231
  %v233 = vsel %vm181, %v166, 0.0
  %234 = vadd.xlane.f32.xlu0 %v233
  %v235 = vpop.xlane.xlu0 %234
  %v236 = vsel %vm181, %v167, 0.0
  %237 = vadd.xlane.f32.xlu0 %v236
  %v238 = vpop.xlane.xlu0 %237
  %v239 = vsel %vm181, %v168, 0.0
  %240 = vadd.xlane.f32.xlu0 %v239
  %v241 = vpop.xlane.xlu0 %240
  %v242 = vsel %vm181, %v169, 0.0
  %243 = vadd.xlane.f32.xlu0 %v242
  %v244 = vpop.xlane.xlu0 %243
  %v245 = vsel %vm181, %v170, 0.0
  %246 = vadd.xlane.f32.xlu0 %v245
  %v247 = vpop.xlane.xlu0 %246
  %v248 = vsel %vm181, %v171, 0.0
  %249 = vadd.xlane.f32.xlu0 %v248
  %v250 = vpop.xlane.xlu0 %249
  %v251 = vsel %vm181, %v172, 0.0
  %252 = vadd.xlane.f32.xlu0 %v251
  %v253 = vpop.xlane.xlu0 %252
  %v254 = vsel %vm181, %v173, 0.0
  %255 = vadd.xlane.f32.xlu0 %v254
  %v256 = vpop.xlane.xlu0 %255
  %v257 = vsel %vm181, %v174, 0.0
  %258 = vadd.xlane.f32.xlu0 %v257
  %v259 = vpop.xlane.xlu0 %258
  %v260 = vsel %vm181, %v175, 0.0
  %261 = vadd.xlane.f32.xlu0 %v260
  %v262 = vpop.xlane.xlu0 %261
  %v263 = vsel %vm181, %v176, 0.0
  %264 = vadd.xlane.f32.xlu0 %v263
  %v265 = vpop.xlane.xlu0 %264
  %v266 = vsel %vm181, %v177, 0.0
  %267 = vadd.xlane.f32.xlu0 %v266
  %v268 = vpop.xlane.xlu0 %267
  %v269 = vsel %vm181, %v178, 0.0
  %270 = vadd.xlane.f32.xlu0 %v269
  %v271 = vpop.xlane.xlu0 %270
  %v272 = vsel %vm181, %v179, 0.0
  %273 = vadd.xlane.f32.xlu0 %v272
  %v274 = vpop.xlane.xlu0 %273
  %v275 = vsel %vm181, %v180, 0.0
  %276 = vadd.xlane.f32.xlu0 %v275
  %v277 = vpop.xlane.xlu0 %276
  %v278 = vld [vmem:[%s3] sm:$0xff]
  %v279 = vlaneseq
  %v280 = vshrl.u32 %v279, 7
  %v281 = vsub.s32 0, %v280
  %v282 = vrot.slane %v278, %v281
  %284 = vbcast.lane.b32.xlu0 %v282, 256
  %v285 = vpop.permute.xlu0 %284
  %s287 = sor.u32 256, 8
  %288 = vbcast.lane.b32.xlu0 %v282, %s287
  %v289 = vpop.permute.xlu0 %288
  %s291 = sor.u32 256, 16
  %292 = vbcast.lane.b32.xlu0 %v282, %s291
  %v293 = vpop.permute.xlu0 %292
  %s295 = sor.u32 256, 24
  %296 = vbcast.lane.b32.xlu0 %v282, %s295
  %v297 = vpop.permute.xlu0 %296
  %v298 = vlaneseq
  %v299 = vshrl.u32 %v298, 7
  %v300 = vsub.s32 1, %v299
  %v301 = vrot.slane %v278, %v300
  %303 = vbcast.lane.b32.xlu0 %v301, 256
  %v304 = vpop.permute.xlu0 %303
  %s306 = sor.u32 256, 8
  %307 = vbcast.lane.b32.xlu0 %v301, %s306
  %v308 = vpop.permute.xlu0 %307
  %s310 = sor.u32 256, 16
  %311 = vbcast.lane.b32.xlu0 %v301, %s310
  %v312 = vpop.permute.xlu0 %311
  %s314 = sor.u32 256, 24
  %315 = vbcast.lane.b32.xlu0 %v301, %s314
  %v316 = vpop.permute.xlu0 %315
  %v317 = vlaneseq
  %v318 = vshrl.u32 %v317, 7
  %v319 = vsub.s32 2, %v318
  %v320 = vrot.slane %v278, %v319
  %322 = vbcast.lane.b32.xlu0 %v320, 256
  %v323 = vpop.permute.xlu0 %322
  %s325 = sor.u32 256, 8
  %326 = vbcast.lane.b32.xlu0 %v320, %s325
  %v327 = vpop.permute.xlu0 %326
  %s329 = sor.u32 256, 16
  %330 = vbcast.lane.b32.xlu0 %v320, %s329
  %v331 = vpop.permute.xlu0 %330
  %s333 = sor.u32 256, 24
  %334 = vbcast.lane.b32.xlu0 %v320, %s333
  %v335 = vpop.permute.xlu0 %334
  %v336 = vlaneseq
  %v337 = vshrl.u32 %v336, 7
  %v338 = vsub.s32 3, %v337
  %v339 = vrot.slane %v278, %v338
  %341 = vbcast.lane.b32.xlu0 %v339, 256
  %v342 = vpop.permute.xlu0 %341
  %s344 = sor.u32 256, 8
  %345 = vbcast.lane.b32.xlu0 %v339, %s344
  %v346 = vpop.permute.xlu0 %345
  %s348 = sor.u32 256, 16
  %349 = vbcast.lane.b32.xlu0 %v339, %s348
  %v350 = vpop.permute.xlu0 %349
  %s352 = sor.u32 256, 24
  %353 = vbcast.lane.b32.xlu0 %v339, %s352
  %v354 = vpop.permute.xlu0 %353
  %v355 = vlaneseq
  %v356 = vshrl.u32 %v355, 7
  %v357 = vsub.s32 4, %v356
  %v358 = vrot.slane %v278, %v357
  %360 = vbcast.lane.b32.xlu0 %v358, 256
  %v361 = vpop.permute.xlu0 %360
  %s363 = sor.u32 256, 8
  %364 = vbcast.lane.b32.xlu0 %v358, %s363
  %v365 = vpop.permute.xlu0 %364
  %s367 = sor.u32 256, 16
  %368 = vbcast.lane.b32.xlu0 %v358, %s367
  %v369 = vpop.permute.xlu0 %368
  %s371 = sor.u32 256, 24
  %372 = vbcast.lane.b32.xlu0 %v358, %s371
  %v373 = vpop.permute.xlu0 %372
  %v374 = vlaneseq
  %v375 = vshrl.u32 %v374, 7
  %v376 = vsub.s32 5, %v375
  %v377 = vrot.slane %v278, %v376
  %379 = vbcast.lane.b32.xlu0 %v377, 256
  %v380 = vpop.permute.xlu0 %379
  %s382 = sor.u32 256, 8
  %383 = vbcast.lane.b32.xlu0 %v377, %s382
  %v384 = vpop.permute.xlu0 %383
  %s386 = sor.u32 256, 16
  %387 = vbcast.lane.b32.xlu0 %v377, %s386
  %v388 = vpop.permute.xlu0 %387
  %s390 = sor.u32 256, 24
  %391 = vbcast.lane.b32.xlu0 %v377, %s390
  %v392 = vpop.permute.xlu0 %391
  %v393 = vlaneseq
  %v394 = vshrl.u32 %v393, 7
  %v395 = vsub.s32 6, %v394
  %v396 = vrot.slane %v278, %v395
  %398 = vbcast.lane.b32.xlu0 %v396, 256
  %v399 = vpop.permute.xlu0 %398
  %s401 = sor.u32 256, 8
  %402 = vbcast.lane.b32.xlu0 %v396, %s401
  %v403 = vpop.permute.xlu0 %402
  %s405 = sor.u32 256, 16
  %406 = vbcast.lane.b32.xlu0 %v396, %s405
  %v407 = vpop.permute.xlu0 %406
  %s409 = sor.u32 256, 24
  %410 = vbcast.lane.b32.xlu0 %v396, %s409
  %v411 = vpop.permute.xlu0 %410
  %v412 = vlaneseq
  %v413 = vshrl.u32 %v412, 7
  %v414 = vsub.s32 7, %v413
  %v415 = vrot.slane %v278, %v414
  %417 = vbcast.lane.b32.xlu0 %v415, 256
  %v418 = vpop.permute.xlu0 %417
  %s420 = sor.u32 256, 8
  %421 = vbcast.lane.b32.xlu0 %v415, %s420
  %v422 = vpop.permute.xlu0 %421
  %s424 = sor.u32 256, 16
  %425 = vbcast.lane.b32.xlu0 %v415, %s424
  %v426 = vpop.permute.xlu0 %425
  %s428 = sor.u32 256, 24
  %429 = vbcast.lane.b32.xlu0 %v415, %s428
  %v430 = vpop.permute.xlu0 %429
  %v431 = vadd.f32 %v184, %v285
  %v432 = vadd.f32 %v187, %v289
  %v433 = vadd.f32 %v190, %v293
  %v434 = vadd.f32 %v193, %v297
  %v435 = vadd.f32 %v196, %v304
  %v436 = vadd.f32 %v199, %v308
  %v437 = vadd.f32 %v202, %v312
  %v438 = vadd.f32 %v205, %v316
  %v439 = vadd.f32 %v208, %v323
  %v440 = vadd.f32 %v211, %v327
  %v441 = vadd.f32 %v214, %v331
  %v442 = vadd.f32 %v217, %v335
  %v443 = vadd.f32 %v220, %v342
  %v444 = vadd.f32 %v223, %v346
  %v445 = vadd.f32 %v226, %v350
  %v446 = vadd.f32 %v229, %v354
  %v447 = vadd.f32 %v232, %v361
  %v448 = vadd.f32 %v235, %v365
  %v449 = vadd.f32 %v238, %v369
  %v450 = vadd.f32 %v241, %v373
  %v451 = vadd.f32 %v244, %v380
  %v452 = vadd.f32 %v247, %v384
  %v453 = vadd.f32 %v250, %v388
  %v454 = vadd.f32 %v253, %v392
  %v455 = vadd.f32 %v256, %v399
  %v456 = vadd.f32 %v259, %v403
  %v457 = vadd.f32 %v262, %v407
  %v458 = vadd.f32 %v265, %v411
  %v459 = vadd.f32 %v268, %v418
  %v460 = vadd.f32 %v271, %v422
  %v461 = vadd.f32 %v274, %v426
  %v462 = vadd.f32 %v277, %v430
  %v463 = vmax.f32 %v431, 0.0
  %v464 = vmax.f32 %v432, 0.0
  %v465 = vmax.f32 %v433, 0.0
  %v466 = vmax.f32 %v434, 0.0
  %v467 = vmax.f32 %v435, 0.0
  %v468 = vmax.f32 %v436, 0.0
  %v469 = vmax.f32 %v437, 0.0
  %v470 = vmax.f32 %v438, 0.0
  %v471 = vmax.f32 %v439, 0.0
  %v472 = vmax.f32 %v440, 0.0
  %v473 = vmax.f32 %v441, 0.0
  %v474 = vmax.f32 %v442, 0.0
  %v475 = vmax.f32 %v443, 0.0
  %v476 = vmax.f32 %v444, 0.0
  %v477 = vmax.f32 %v445, 0.0
  %v478 = vmax.f32 %v446, 0.0
  %v479 = vmax.f32 %v447, 0.0
  %v480 = vmax.f32 %v448, 0.0
  %v481 = vmax.f32 %v449, 0.0
  %v482 = vmax.f32 %v450, 0.0
  %v483 = vmax.f32 %v451, 0.0
  %v484 = vmax.f32 %v452, 0.0
  %v485 = vmax.f32 %v453, 0.0
  %v486 = vmax.f32 %v454, 0.0
  %v487 = vmax.f32 %v455, 0.0
  %v488 = vmax.f32 %v456, 0.0
  %v489 = vmax.f32 %v457, 0.0
  %v490 = vmax.f32 %v458, 0.0
  %v491 = vmax.f32 %v459, 0.0
  %v492 = vmax.f32 %v460, 0.0
  %v493 = vmax.f32 %v461, 0.0
  %v494 = vmax.f32 %v462, 0.0
  %v495 = vld [vmem:[%s4] sm:$0xff]
  %v496 = vld [vmem:[%s4 + $0x8] sm:$0xff]
  %v497 = vld [vmem:[%s4 + $0x10] sm:$0xff]
  %v498 = vld [vmem:[%s4 + $0x18] sm:$0xff]
  %v499 = vld [vmem:[%s4 + $0x20] sm:$0xff]
  %v500 = vld [vmem:[%s4 + $0x28] sm:$0xff]
  %v501 = vld [vmem:[%s4 + $0x30] sm:$0xff]
  %v502 = vld [vmem:[%s4 + $0x38] sm:$0xff]
  %v503 = vld [vmem:[%s4 + $0x40] sm:$0xff]
  %v504 = vld [vmem:[%s4 + $0x48] sm:$0xff]
  %v505 = vld [vmem:[%s4 + $0x50] sm:$0xff]
  %v506 = vld [vmem:[%s4 + $0x58] sm:$0xff]
  %v507 = vld [vmem:[%s4 + $0x60] sm:$0xff]
  %v508 = vld [vmem:[%s4 + $0x68] sm:$0xff]
  %v509 = vld [vmem:[%s4 + $0x70] sm:$0xff]
  %v510 = vld [vmem:[%s4 + $0x78] sm:$0xff]
  %v511 = vld [vmem:[%s4 + $0x80] sm:$0xff]
  %v512 = vld [vmem:[%s4 + $0x88] sm:$0xff]
  %v513 = vld [vmem:[%s4 + $0x90] sm:$0xff]
  %v514 = vld [vmem:[%s4 + $0x98] sm:$0xff]
  %v515 = vld [vmem:[%s4 + $0xa0] sm:$0xff]
  %v516 = vld [vmem:[%s4 + $0xa8] sm:$0xff]
  %v517 = vld [vmem:[%s4 + $0xb0] sm:$0xff]
  %v518 = vld [vmem:[%s4 + $0xb8] sm:$0xff]
  %v519 = vld [vmem:[%s4 + $0xc0] sm:$0xff]
  %v520 = vld [vmem:[%s4 + $0xc8] sm:$0xff]
  %v521 = vld [vmem:[%s4 + $0xd0] sm:$0xff]
  %v522 = vld [vmem:[%s4 + $0xd8] sm:$0xff]
  %v523 = vld [vmem:[%s4 + $0xe0] sm:$0xff]
  %v524 = vld [vmem:[%s4 + $0xe8] sm:$0xff]
  %v525 = vld [vmem:[%s4 + $0xf0] sm:$0xff]
  %v526 = vld [vmem:[%s4 + $0xf8] sm:$0xff]
  %v527 = vmul.f32 %v463, %v495
  %v528 = vmul.f32 %v464, %v496
  %v529 = vmul.f32 %v465, %v497
  %v530 = vmul.f32 %v466, %v498
  %v531 = vmul.f32 %v467, %v499
  %v532 = vmul.f32 %v468, %v500
  %v533 = vmul.f32 %v469, %v501
  %v534 = vmul.f32 %v470, %v502
  %v535 = vmul.f32 %v471, %v503
  %v536 = vmul.f32 %v472, %v504
  %v537 = vmul.f32 %v473, %v505
  %v538 = vmul.f32 %v474, %v506
  %v539 = vmul.f32 %v475, %v507
  %v540 = vmul.f32 %v476, %v508
  %v541 = vmul.f32 %v477, %v509
  %v542 = vmul.f32 %v478, %v510
  %v543 = vmul.f32 %v479, %v511
  %v544 = vmul.f32 %v480, %v512
  %v545 = vmul.f32 %v481, %v513
  %v546 = vmul.f32 %v482, %v514
  %v547 = vmul.f32 %v483, %v515
  %v548 = vmul.f32 %v484, %v516
  %v549 = vmul.f32 %v485, %v517
  %v550 = vmul.f32 %v486, %v518
  %v551 = vmul.f32 %v487, %v519
  %v552 = vmul.f32 %v488, %v520
  %v553 = vmul.f32 %v489, %v521
  %v554 = vmul.f32 %v490, %v522
  %v555 = vmul.f32 %v491, %v523
  %v556 = vmul.f32 %v492, %v524
  %v557 = vmul.f32 %v493, %v525
  %v558 = vmul.f32 %v494, %v526
  %vm559 = vcmask 23552
  %v560 = vsel %vm559, %v527, 0.0
  %v561 = vsel %vm559, %v528, 0.0
  %v562 = vadd.f32 %v560, %v561
  %v563 = vsel %vm559, %v529, 0.0
  %v564 = vadd.f32 %v562, %v563
  %v565 = vsel %vm559, %v530, 0.0
  %v566 = vadd.f32 %v564, %v565
  %v567 = vrot.slane %v566, 4
  %v568 = vadd.f32 %v566, %v567
  %v569 = vrot.slane %v568, 2
  %v570 = vadd.f32 %v568, %v569
  %v571 = vrot.slane %v570, 1
  %v572 = vadd.f32 %v570, %v571
  %v573 = vsel %vm559, %v531, 0.0
  %v574 = vsel %vm559, %v532, 0.0
  %v575 = vadd.f32 %v573, %v574
  %v576 = vsel %vm559, %v533, 0.0
  %v577 = vadd.f32 %v575, %v576
  %v578 = vsel %vm559, %v534, 0.0
  %v579 = vadd.f32 %v577, %v578
  %v580 = vrot.slane %v579, 4
  %v581 = vadd.f32 %v579, %v580
  %v582 = vrot.slane %v581, 2
  %v583 = vadd.f32 %v581, %v582
  %v584 = vrot.slane %v583, 1
  %v585 = vadd.f32 %v583, %v584
  %v586 = vsel %vm559, %v535, 0.0
  %v587 = vsel %vm559, %v536, 0.0
  %v588 = vadd.f32 %v586, %v587
  %v589 = vsel %vm559, %v537, 0.0
  %v590 = vadd.f32 %v588, %v589
  %v591 = vsel %vm559, %v538, 0.0
  %v592 = vadd.f32 %v590, %v591
  %v593 = vrot.slane %v592, 4
  %v594 = vadd.f32 %v592, %v593
  %v595 = vrot.slane %v594, 2
  %v596 = vadd.f32 %v594, %v595
  %v597 = vrot.slane %v596, 1
  %v598 = vadd.f32 %v596, %v597
  %v599 = vsel %vm559, %v539, 0.0
  %v600 = vsel %vm559, %v540, 0.0
  %v601 = vadd.f32 %v599, %v600
  %v602 = vsel %vm559, %v541, 0.0
  %v603 = vadd.f32 %v601, %v602
  %v604 = vsel %vm559, %v542, 0.0
  %v605 = vadd.f32 %v603, %v604
  %v606 = vrot.slane %v605, 4
  %v607 = vadd.f32 %v605, %v606
  %v608 = vrot.slane %v607, 2
  %v609 = vadd.f32 %v607, %v608
  %v610 = vrot.slane %v609, 1
  %v611 = vadd.f32 %v609, %v610
  %v612 = vsel %vm559, %v543, 0.0
  %v613 = vsel %vm559, %v544, 0.0
  %v614 = vadd.f32 %v612, %v613
  %v615 = vsel %vm559, %v545, 0.0
  %v616 = vadd.f32 %v614, %v615
  %v617 = vsel %vm559, %v546, 0.0
  %v618 = vadd.f32 %v616, %v617
  %v619 = vrot.slane %v618, 4
  %v620 = vadd.f32 %v618, %v619
  %v621 = vrot.slane %v620, 2
  %v622 = vadd.f32 %v620, %v621
  %v623 = vrot.slane %v622, 1
  %v624 = vadd.f32 %v622, %v623
  %v625 = vsel %vm559, %v547, 0.0
  %v626 = vsel %vm559, %v548, 0.0
  %v627 = vadd.f32 %v625, %v626
  %v628 = vsel %vm559, %v549, 0.0
  %v629 = vadd.f32 %v627, %v628
  %v630 = vsel %vm559, %v550, 0.0
  %v631 = vadd.f32 %v629, %v630
  %v632 = vrot.slane %v631, 4
  %v633 = vadd.f32 %v631, %v632
  %v634 = vrot.slane %v633, 2
  %v635 = vadd.f32 %v633, %v634
  %v636 = vrot.slane %v635, 1
  %v637 = vadd.f32 %v635, %v636
  %v638 = vsel %vm559, %v551, 0.0
  %v639 = vsel %vm559, %v552, 0.0
  %v640 = vadd.f32 %v638, %v639
  %v641 = vsel %vm559, %v553, 0.0
  %v642 = vadd.f32 %v640, %v641
  %v643 = vsel %vm559, %v554, 0.0
  %v644 = vadd.f32 %v642, %v643
  %v645 = vrot.slane %v644, 4
  %v646 = vadd.f32 %v644, %v645
  %v647 = vrot.slane %v646, 2
  %v648 = vadd.f32 %v646, %v647
  %v649 = vrot.slane %v648, 1
  %v650 = vadd.f32 %v648, %v649
  %v651 = vsel %vm559, %v555, 0.0
  %v652 = vsel %vm559, %v556, 0.0
  %v653 = vadd.f32 %v651, %v652
  %v654 = vsel %vm559, %v557, 0.0
  %v655 = vadd.f32 %v653, %v654
  %v656 = vsel %vm559, %v558, 0.0
  %v657 = vadd.f32 %v655, %v656
  %v658 = vrot.slane %v657, 4
  %v659 = vadd.f32 %v657, %v658
  %v660 = vrot.slane %v659, 2
  %v661 = vadd.f32 %v659, %v660
  %v662 = vrot.slane %v661, 1
  %v663 = vadd.f32 %v661, %v662
  %v664 = vld [vmem:[%s5] sm:$0xff]
  %v666 = vrot.slane %v664, 1
  %v667 = vrot.slane %v664, 2
  %v668 = vrot.slane %v664, 3
  %v669 = vrot.slane %v664, 4
  %v670 = vrot.slane %v664, 5
  %v671 = vrot.slane %v664, 6
  %v672 = vrot.slane %v664, 7
  %v681 = vadd.f32 %v572, %v664
  %v682 = vadd.f32 %v585, %v666
  %v683 = vadd.f32 %v598, %v667
  %v684 = vadd.f32 %v611, %v668
  %v685 = vadd.f32 %v624, %v669
  %v686 = vadd.f32 %v637, %v670
  %v687 = vadd.f32 %v650, %v671
  %v688 = vadd.f32 %v663, %v672
  %v697 = vrot.slane %v682, 7
  %vm698 = vcmask 1041409
  %v699 = vsel %vm698, %v697, %v681
  %v700 = vrot.slane %v683, 6
  %vm701 = vcmask 1042434
  %v702 = vsel %vm701, %v700, %v699
  %v703 = vrot.slane %v684, 5
  %vm704 = vcmask 1043459
  %v705 = vsel %vm704, %v703, %v702
  %v706 = vrot.slane %v685, 4
  %vm707 = vcmask 1044484
  %v708 = vsel %vm707, %v706, %v705
  %v709 = vrot.slane %v686, 3
  %vm710 = vcmask 1045509
  %v711 = vsel %vm710, %v709, %v708
  %v712 = vrot.slane %v687, 2
  %vm713 = vcmask 1046534
  %v714 = vsel %vm713, %v712, %v711
  %v715 = vrot.slane %v688, 1
  %vm716 = vcmask 1047559
  %v717 = vsel %vm716, %v715, %v714
  %719 = vst.msk [vmem:[%s6] sm:$0xff] %vm559, %v717
  // Predicated region
  $region26: #{tpu_custom_call.1} parent=0 // pred_check
    _
  $region27: #{tpu_custom_call.1} parent=0 // pred_check_branch
    %721 = sbr.rel (0) target = $region29
  $region28: #{tpu_custom_call.1} parent=0 // pred_region
    _
  $region29: #{tpu_custom_call.1} parent=0 // pred_fallthru
    _
  // Predicated region
  $region30: #{tpu_custom_call.1} parent=0 // pred_check
    _
  $region31: #{tpu_custom_call.1} parent=0 // pred_check_branch
    %723 = sbr.rel (0) target = $region33
  $region32: #{tpu_custom_call.1} parent=0 // pred_region
    _
  $region33: #{tpu_custom_call.1} parent=0 // pred_fallthru
    _

</llo_original>
